<compile_context>
chip_gen: v6e
topology: v6e:2x2x1
jax: 0.10.0
libtpu: 0.0.40
codegen_flags: <defaults>
</compile_context>

<pallas_src>
import functools

import jax
import jax.numpy as jnp
from jax import lax
from jax.experimental import pallas as pl
from jax.experimental.pallas import tpu as pltpu


def _round_up(x: int, m: int) -> int:
    return ((x + m - 1) // m) * m


def _pick_tile(total: int, desired: int, granule: int) -> int:
    """Largest multiple of `granule` that divides `total` and is <= desired."""
    best = granule
    cand = granule
    limit = min(desired, total)
    while cand <= limit:
        if total % cand == 0:
            best = cand
        cand += granule
    return best


def _kernel_accum_into_out(x_ref, w_ref, b_ref, o_ref):
    """f32 output: accumulate straight into the K-resident output block."""
    k = pl.program_id(2)

    @pl.when(k == 0)
    def _():
        o_ref[...] = jnp.zeros_like(o_ref)

    o_ref[...] += jnp.dot(x_ref[...], w_ref[...],
                          preferred_element_type=jnp.float32)

    @pl.when(k == pl.num_programs(2) - 1)
    def _():
        o_ref[...] += b_ref[...].astype(o_ref.dtype)


def _kernel_with_scratch(x_ref, w_ref, b_ref, o_ref, acc_ref):
    """Narrow (e.g. bf16) output: accumulate in f32 scratch, cast at finalize."""
    k = pl.program_id(2)

    @pl.when(k == 0)
    def _():
        acc_ref[...] = jnp.zeros_like(acc_ref)

    acc_ref[...] += jnp.dot(x_ref[...], w_ref[...],
                            preferred_element_type=jnp.float32)

    @pl.when(k == pl.num_programs(2) - 1)
    def _():
        o_ref[...] = (acc_ref[...] + b_ref[...]).astype(o_ref.dtype)


def make_linear(weight, bias=None, *, compute_dtype=jnp.bfloat16,
                tm=512, tn=512, tk=1024):
    """Build y = x @ weight.T + bias as a jitted Pallas TPU GEMM.

    weight: (C, D) in PyTorch nn.Linear layout; cast / transposed / 128-padded
            ONCE here (parameter-load time), not per call.
    bias:   (C,) or None.
    Returns apply(x) for x of shape (..., D); output (..., C) in x.dtype.
    """
    C, D = weight.shape
    if bias is None:
        bias = jnp.zeros((C,), jnp.float32)

    Cp = _round_up(C, 128)
    Dp = _round_up(D, 128)

    # ---- one-time parameter preparation (outside the per-call hot path) ----
    wt = jnp.asarray(weight, jnp.float32).T                        # (D, C)
    if Dp != D or Cp != C:
        wt = jnp.pad(wt, ((0, Dp - D), (0, Cp - C)))
    wt = wt.astype(compute_dtype)                                  # (Dp, Cp)

    b2d = jnp.asarray(bias, jnp.float32)
    if Cp != C:
        b2d = jnp.pad(b2d, (0, Cp - C))
    b2d = b2d.reshape(1, Cp)                                       # f32 bias

    cbytes = jnp.dtype(compute_dtype).itemsize
    sub = 16 if cbytes == 2 else 8        # bf16 min sublane tile is 16 rows

    @jax.jit
    def _apply2d(x2d, wt_, b_):
        B = x2d.shape[0]
        out_dtype = x2d.dtype
        obytes = jnp.dtype(out_dtype).itemsize

        Bp = _round_up(B, sub)
        tm_ = _pick_tile(Bp, tm, sub)
        tn_ = _pick_tile(Cp, tn, 128)
        tk_ = _pick_tile(Dp, tk, 128)

        # v7x megacore: ensure at least one parallel grid axis has extent >= 2
        # (prefer splitting N, else M) so both TensorCores get work.
        if Bp // tm_ == 1 and Cp // tn_ == 1:
            if Cp // 128 >= 2:
                tn_ = _pick_tile(Cp, Cp // 2, 128)
            elif Bp // sub >= 2:
                tm_ = _pick_tile(Bp, Bp // 2, sub)

        xp = x2d
        if Bp != B or Dp != D:
            xp = jnp.pad(xp, ((0, Bp - B), (0, Dp - D)))
        xp = xp.astype(compute_dtype)

        grid = (Bp // tm_, Cp // tn_, Dp // tk_)

        f32_out = (out_dtype == jnp.float32)
        kernel = _kernel_accum_into_out if f32_out else _kernel_with_scratch
        scratch = [] if f32_out else [pltpu.VMEM((tm_, tn_), jnp.float32)]

        # Double-buffered footprint; keep headroom under v7x's 64 MiB / TC.
        vmem_bytes = (
            2 * (tm_ * tk_ + tk_ * tn_) * cbytes   # x / W tiles (double-buffered)
            + 2 * tn_ * 4                          # bias tile (f32)
            + 2 * tm_ * tn_ * obytes               # output block
            + (0 if f32_out else tm_ * tn_ * 4))   # f32 accumulator scratch
        vmem_limit = int(min(max(2 * vmem_bytes, 16 * 1024 * 1024),
                             48 * 1024 * 1024))

        cost = pl.CostEstimate(
            flops=2 * B * D * C,
            transcendentals=0,
            bytes_accessed=(cbytes * Bp * Dp * grid[1]    # x re-read per N tile
                            + cbytes * Dp * Cp * grid[0]  # W re-read per M tile
                            + obytes * Bp * Cp
                            + 4 * Cp))

        out = pl.pallas_call(
            kernel,
            out_shape=jax.ShapeDtypeStruct((Bp, Cp), out_dtype),
            grid_spec=pltpu.PrefetchScalarGridSpec(
                num_scalar_prefetch=0,
                grid=grid,
                in_specs=[
                    pl.BlockSpec((tm_, tk_), lambda i, j, k: (i, k)),  # x
                    pl.BlockSpec((tk_, tn_), lambda i, j, k: (k, j)),  # W^T (D,C)
                    pl.BlockSpec((1, tn_), lambda i, j, k: (0, j)),    # bias
                ],
                out_specs=pl.BlockSpec((tm_, tn_), lambda i, j, k: (i, j)),
                scratch_shapes=scratch,
            ),
            compiler_params=pltpu.CompilerParams(
                dimension_semantics=("parallel", "parallel", "arbitrary"),
                vmem_limit_bytes=vmem_limit,
            ),
            cost_estimate=cost,
        )(xp, wt_, b_)

        return out[:B, :C]

    def apply(x):
        assert x.shape[-1] == D, f"expected last dim {D}, got {x.shape}"
        lead = x.shape[:-1]
        y = _apply2d(x.reshape(-1, D), wt, b2d)
        return y.reshape(*lead, C)

    return apply


if __name__ == "__main__":
    key = jax.random.PRNGKey(0)
    kx, kw, kb, kx2, kw2, kb2 = jax.random.split(key, 6)

    # --- Small shapes consistent with the module -----------------------------
    batch, input_dimension, num_classes = 8, 32, 16
    x = jax.random.normal(kx, (batch, input_dimension), dtype=jnp.float32)
    weight = jax.random.normal(
        kw, (num_classes, input_dimension), dtype=jnp.float32) * 0.1
    bias = jax.random.normal(kb, (num_classes,), dtype=jnp.float32) * 0.1

    # (a) f32-compute path (parity with fp32 nn.Linear)
    lin_f32 = make_linear(weight, bias, compute_dtype=jnp.float32)
    out = jax.block_until_ready(lin_f32(x))
    ref = jnp.dot(x, weight.T, precision=lax.Precision.HIGHEST) + bias
    assert out.shape == (batch, num_classes)
    assert jnp.allclose(out, ref, atol=1e-4, rtol=1e-4), "f32 small-shape mismatch"

    # (b) default bf16-MXU path (f32 accumulate), f32 in / f32 out
    lin_bf16 = make_linear(weight, bias)  # compute_dtype=bf16 default
    out_b = jax.block_until_ready(lin_bf16(x))
    xb = x.astype(jnp.bfloat16).astype(jnp.float32)
    wb = weight.astype(jnp.bfloat16).astype(jnp.float32)
    ref_b = jnp.dot(xb, wb.T, precision=lax.Precision.HIGHEST) + bias
    assert out_b.dtype == x.dtype
    assert jnp.allclose(out_b, ref_b, atol=2e-3, rtol=2e-3), "bf16 small mismatch"

    # (c) bf16 in / bf16 out: exercises the f32-scratch finalize path
    out_c = jax.block_until_ready(lin_bf16(x.astype(jnp.bfloat16)))
    assert out_c.dtype == jnp.bfloat16
    assert jnp.allclose(out_c.astype(jnp.float32), ref_b,
                        atol=5e-2, rtol=5e-2), "bf16-out mismatch"

    # --- Medium shapes: non-128-divisible C/D, divisor-snapped tiles, N split -
    B2, D2, C2 = 256, 640, 384
    x2 = jax.random.normal(kx2, (B2, D2), dtype=jnp.float32)
    w2 = jax.random.normal(kw2, (C2, D2), dtype=jnp.float32) * 0.05
    b2 = jax.random.normal(kb2, (C2,), dtype=jnp.float32) * 0.05
    lin2 = make_linear(w2, b2)
    out2 = jax.block_until_ready(lin2(x2))
    x2b = x2.astype(jnp.bfloat16).astype(jnp.float32)
    w2b = w2.astype(jnp.bfloat16).astype(jnp.float32)
    ref2 = jnp.dot(x2b, w2b.T, precision=lax.Precision.HIGHEST) + b2
    assert out2.shape == (B2, C2)
    assert jnp.allclose(out2, ref2, atol=5e-3, rtol=5e-3), "medium-shape mismatch"

    print("KERNEL_OK")
</pallas_src>

<mosaic_0001>
module attributes {stable_mosaic.version = 11 : i64} {
  func.func @_kernel_accum_into_out(%arg0: i32, %arg1: i32, %arg2: i32, %arg3: memref<8x128xf32, #tpu.memory_space<vmem>>, %arg4: memref<128x128xf32, #tpu.memory_space<vmem>>, %arg5: memref<1x128xf32, #tpu.memory_space<vmem>>, %arg6: memref<8x128xf32, #tpu.memory_space<vmem>>) attributes {dimension_semantics = [#tpu.dimension_semantics<parallel>, #tpu.dimension_semantics<parallel>, #tpu.dimension_semantics<arbitrary>], iteration_bounds = array<i64: 1, 1, 1>, scalar_prefetch = 0 : i64, scratch_operands = 0 : i64, tpu.core_type = #tpu.core_type<tc>, window_params = [{transform_indices = @transform_0, window_bounds = array<i64: 8, 128>}, {transform_indices = @transform_1, window_bounds = array<i64: 128, 128>}, {transform_indices = @transform_2, window_bounds = array<i64: 1, 128>}, {transform_indices = @transform_3, window_bounds = array<i64: 8, 128>}]} {
    %c0_i32 = arith.constant 0 : i32
    %0 = arith.cmpi eq, %arg2, %c0_i32 : i32
    %1 = arith.extui %0 : i1 to i32
    %c0_i32_0 = arith.constant 0 : i32
    %2 = arith.cmpi ne, %1, %c0_i32_0 : i32
    scf.if %2 {
      %cst_10 = arith.constant 0.000000e+00 : f32
      %12 = vector.broadcast %cst_10 : f32 to vector<8x128xf32>
      %c0_11 = arith.constant 0 : index
      %c0_12 = arith.constant 0 : index
      %13 = vector.load %arg6[%c0_11, %c0_12] : memref<8x128xf32, #tpu.memory_space<vmem>>, vector<8x128xf32>
      tpu.vector_store %arg6[%c0_11, %c0_12], %12 {strides = array<i32>} : memref<8x128xf32, #tpu.memory_space<vmem>>, vector<8x128xf32>,
    } else {
    }
    %c0 = arith.constant 0 : index
    %c0_1 = arith.constant 0 : index
    %3 = vector.load %arg6[%c0, %c0_1] : memref<8x128xf32, #tpu.memory_space<vmem>>, vector<8x128xf32>
    %c0_2 = arith.constant 0 : index
    %c0_3 = arith.constant 0 : index
    %4 = vector.load %arg3[%c0_2, %c0_3] : memref<8x128xf32, #tpu.memory_space<vmem>>, vector<8x128xf32>
    %c0_4 = arith.constant 0 : index
    %c0_5 = arith.constant 0 : index
    %5 = vector.load %arg4[%c0_4, %c0_5] : memref<128x128xf32, #tpu.memory_space<vmem>>, vector<128x128xf32>
    %cst = arith.constant dense<0.000000e+00> : vector<8x128xf32>
    %6 = tpu.matmul %4, %5, %cst {dimension_numbers = #tpu.dot_dimension_numbers<[1], [0], [0], [1], [0, 0, 1, 1], [], []>} : vector<8x128xf32>, vector<128x128xf32>, vector<8x128xf32> -> vector<8x128xf32>
    %7 = arith.addf %3, %6 : vector<8x128xf32>
    %c0_6 = arith.constant 0 : index
    %c0_7 = arith.constant 0 : index
    %8 = vector.load %arg6[%c0_6, %c0_7] : memref<8x128xf32, #tpu.memory_space<vmem>>, vector<8x128xf32>
    tpu.vector_store %arg6[%c0_6, %c0_7], %7 {strides = array<i32>} : memref<8x128xf32, #tpu.memory_space<vmem>>, vector<8x128xf32>,
    %c0_i32_8 = arith.constant 0 : i32
    %9 = arith.cmpi eq, %arg2, %c0_i32_8 : i32
    %10 = arith.extui %9 : i1 to i32
    %c0_i32_9 = arith.constant 0 : i32
    %11 = arith.cmpi ne, %10, %c0_i32_9 : i32
    scf.if %11 {
      %c0_10 = arith.constant 0 : index
      %c0_11 = arith.constant 0 : index
      %12 = vector.load %arg6[%c0_10, %c0_11] : memref<8x128xf32, #tpu.memory_space<vmem>>, vector<8x128xf32>
      %c0_12 = arith.constant 0 : index
      %c0_13 = arith.constant 0 : index
      %13 = vector.load %arg5[%c0_12, %c0_13] : memref<1x128xf32, #tpu.memory_space<vmem>>, vector<1x128xf32>
      %14 = vector.broadcast %13 : vector<1x128xf32> to vector<8x128xf32>
      %15 = arith.addf %12, %14 : vector<8x128xf32>
      %c0_14 = arith.constant 0 : index
      %c0_15 = arith.constant 0 : index
      %16 = vector.load %arg6[%c0_14, %c0_15] : memref<8x128xf32, #tpu.memory_space<vmem>>, vector<8x128xf32>
      tpu.vector_store %arg6[%c0_14, %c0_15], %15 {strides = array<i32>} : memref<8x128xf32, #tpu.memory_space<vmem>>, vector<8x128xf32>,
    } else {
    }
    return
  }
  func.func @transform_0(%arg0: i32, %arg1: i32, %arg2: i32) -> (i32, i32) {
    %c0_i32 = arith.constant 0 : i32
    return %arg0, %arg2 : i32, i32
  }
  func.func @transform_1(%arg0: i32, %arg1: i32, %arg2: i32) -> (i32, i32) {
    %c0_i32 = arith.constant 0 : i32
    return %arg2, %arg1 : i32, i32
  }
  func.func @transform_2(%arg0: i32, %arg1: i32, %arg2: i32) -> (i32, i32) {
    %c0_i32 = arith.constant 0 : i32
    %c0_i32_0 = arith.constant 0 : i32
    return %c0_i32, %arg1 : i32, i32
  }
  func.func @transform_3(%arg0: i32, %arg1: i32, %arg2: i32) -> (i32, i32) {
    %c0_i32 = arith.constant 0 : i32
    return %arg0, %arg1 : i32, i32
  }
}

</mosaic_0001>

<llo_original>
// kernel: _apply2d.1
$region0: #{_apply2d.1}
  #allocation0 [shape = 'u32[]', space=smem, size = 0x4, offset = 0x4, fixed_abs, tag = 'smem constant byte address 0x4 - core index']
  #allocation1 [shape = 'u32[144,128]{1,0:T(1,128)}', space=vmem, size = 0x12000, scoped, tag = 'internal scratch']
  %s0 = inlined_call_operand.vmem [shape: f32[8,128], index: 0, kind: input, shape index: {}]
  %s1 = inlined_call_operand.hbm [shape: f32[128,128], index: 1, kind: input, shape index: {}]
  %s2 = inlined_call_operand.vmem [shape: f32[1,128], index: 2, kind: input, shape index: {}]
  %s3 = inlined_call_operand.hbm [shape: f32[8,128], index: 3, kind: output, shape index: {}]
  %s4 = sld [smem:[#allocation0]]
  $region34: #{_apply2d.1} parent=0
    _
  %s6 = ssub.s32 1, %s4
  %s7 = scalar_select 0, %s6, %s4
  $region1: #{_apply2d.1} parent=0
    #allocation2 [shape = 'u8[65536]{0}', space=vmem, size = 0x10000, scoped, tag = 'input window, operand 1, single buffered']
    #allocation3 [shape = 's32[1]{0}', space=sflag, size = 0x4, scoped, tag = 'scoped memory for _apply2d.1']
    #allocation4 [shape = 's32[1]{0}', space=sflag, size = 0x4, scoped, tag = 'scoped memory for _apply2d.1']
    #allocation5 [shape = 'u8[4096]{0}', space=vmem, size = 0x1000, scoped, tag = 'output window, operand 0, single buffered']
    %8 = vsyncpa [#allocation3], 0
    %9 = vsyncpa [#allocation4], 0
    // Predicated region
    $region2: #{_apply2d.1} parent=1 // pred_check
      _
    $region3: #{_apply2d.1} parent=1 // pred_check_branch
      %11 = sbr.rel (0) target = $region5
    $region4: #{_apply2d.1} parent=1 // pred_region
      _
    $region5: #{_apply2d.1} parent=1 // pred_fallthru
      _
    // Predicated region
    $region6: #{_apply2d.1} parent=1 // pred_check
      _
    $region7: #{_apply2d.1} parent=1 // pred_check_branch
      %13 = sbr.rel (0) target = $region9
    $region8: #{_apply2d.1} parent=1 // pred_region
      %s15 = ssub.s32 2048, 2048
      %16 = vsyncadd [#allocation3], %s15
      %s17 = sshll.u32 [#allocation2], 4
      %s18 = int_to_ptr.vmem [resolvable:$true] %s17
      %23 = dma.hbm_to_vmem [thread:$0]  %s1, 2048, %s18, [#allocation3], 128, 128, 8
    $region9: #{_apply2d.1} parent=1 // pred_fallthru
      _
    // Predicated region
    $region10: #{_apply2d.1} parent=1 // pred_check
      _
    $region11: #{_apply2d.1} parent=1 // pred_check_branch
      %25 = sbr.rel (0) target = $region13
    $region12: #{_apply2d.1} parent=1 // pred_region
      _
    $region13: #{_apply2d.1} parent=1 // pred_fallthru
      _
    // Predicated region
    $region14: #{_apply2d.1} parent=1 // pred_check
      _
    $region15: #{_apply2d.1} parent=1 // pred_check_branch
      %27 = sbr.rel (0) target = $region17
    $region16: #{_apply2d.1} parent=1 // pred_region
      %28 = dma.done [#allocation3], 2048
    $region17: #{_apply2d.1} parent=1 // pred_fallthru
      _
    %p29 = scmp.eq.s32.totalorder 0, 0
    // Predicated region
    $region18: #{_apply2d.1} parent=1 // pred_check
      %p30 = pneg %p29
    $region19: #{_apply2d.1} parent=1 // pred_check_branch
      %32 = sbr.rel (%p30) target = $region21
    $region20: #{_apply2d.1} parent=1 // pred_region
      %33 = vst [vmem:[#allocation5] sm:$0xff] 0.0
    $region21: #{_apply2d.1} parent=1 // pred_fallthru
      _
    %v34 = vld [vmem:[#allocation5] sm:$0xff]
    %v35 = vld [vmem:[%s0] sm:$0xff]
    %v36 = vld [vmem:[#allocation2] sm:$0xff]
    %v37 = vld [vmem:[#allocation2 + $0x8] sm:$0xff]
    %v38 = vld [vmem:[#allocation2 + $0x10] sm:$0xff]
    %v39 = vld [vmem:[#allocation2 + $0x18] sm:$0xff]
    %v40 = vld [vmem:[#allocation2 + $0x20] sm:$0xff]
    %v41 = vld [vmem:[#allocation2 + $0x28] sm:$0xff]
    %v42 = vld [vmem:[#allocation2 + $0x30] sm:$0xff]
    %v43 = vld [vmem:[#allocation2 + $0x38] sm:$0xff]
    %v44 = vld [vmem:[#allocation2 + $0x40] sm:$0xff]
    %v45 = vld [vmem:[#allocation2 + $0x48] sm:$0xff]
    %v46 = vld [vmem:[#allocation2 + $0x50] sm:$0xff]
    %v47 = vld [vmem:[#allocation2 + $0x58] sm:$0xff]
    %v48 = vld [vmem:[#allocation2 + $0x60] sm:$0xff]
    %v49 = vld [vmem:[#allocation2 + $0x68] sm:$0xff]
    %v50 = vld [vmem:[#allocation2 + $0x70] sm:$0xff]
    %v51 = vld [vmem:[#allocation2 + $0x78] sm:$0xff]
    %52 = vmatprep.subr.mxu0 0.0
    %53 = vmatpush1.msra.mxu0 %v51
    %54 = vmatprep.subr.mxu0 0.0
    %55 = vmatpush1.msra.mxu0 %v50
    %56 = vmatprep.subr.mxu0 0.0
    %57 = vmatpush1.msra.mxu0 %v49
    %58 = vmatprep.subr.mxu0 0.0
    %59 = vmatpush1.msra.mxu0 %v48
    %60 = vmatprep.subr.mxu0 0.0
    %61 = vmatpush1.msra.mxu0 %v47
    %62 = vmatprep.subr.mxu0 0.0
    %63 = vmatpush1.msra.mxu0 %v46
    %64 = vmatprep.subr.mxu0 0.0
    %65 = vmatpush1.msra.mxu0 %v45
    %66 = vmatprep.subr.mxu0 0.0
    %67 = vmatpush1.msra.mxu0 %v44
    %68 = vmatprep.subr.mxu0 0.0
    %69 = vmatpush1.msra.mxu0 %v43
    %70 = vmatprep.subr.mxu0 0.0
    %71 = vmatpush1.msra.mxu0 %v42
    %72 = vmatprep.subr.mxu0 0.0
    %73 = vmatpush1.msra.mxu0 %v41
    %74 = vmatprep.subr.mxu0 0.0
    %75 = vmatpush1.msra.mxu0 %v40
    %76 = vmatprep.subr.mxu0 0.0
    %77 = vmatpush1.msra.mxu0 %v39
    %78 = vmatprep.subr.mxu0 0.0
    %79 = vmatpush1.msra.mxu0 %v38
    %80 = vmatprep.subr.mxu0 0.0
    %81 = vmatpush1.msra.mxu0 %v37
    %82 = vmatprep.subr.mxu0 0.0
    %83 = vmatpush1.msra.mxu0 %v36
    %84 = vmatprep.subr.mxu0 0.0
    %85 = vmatpush2.msra.mxu0 0.0
    %86 = vmatprep.subr.mxu0 0.0
    %87 = vmatpush2.msra.mxu0 0.0
    %88 = vmatprep.subr.mxu0 0.0
    %89 = vmatpush2.msra.mxu0 0.0
    %90 = vmatprep.subr.mxu0 0.0
    %91 = vmatpush2.msra.mxu0 0.0
    %92 = vmatprep.subr.mxu0 0.0
    %93 = vmatpush2.msra.mxu0 0.0
    %94 = vmatprep.subr.mxu0 0.0
    %95 = vmatpush2.msra.mxu0 0.0
    %96 = vmatprep.subr.mxu0 0.0
    %97 = vmatpush2.msra.mxu0 0.0
    %98 = vmatprep.subr.mxu0 0.0
    %99 = vmatpush2.msra.mxu0 0.0
    %100 = vmatprep.subr.mxu0 0.0
    %101 = vmatpush2.msra.mxu0 0.0
    %102 = vmatprep.subr.mxu0 0.0
    %103 = vmatpush2.msra.mxu0 0.0
    %104 = vmatprep.subr.mxu0 0.0
    %105 = vmatpush2.msra.mxu0 0.0
    %106 = vmatprep.subr.mxu0 0.0
    %107 = vmatpush2.msra.mxu0 0.0
    %108 = vmatprep.subr.mxu0 0.0
    %109 = vmatpush2.msra.mxu0 0.0
    %110 = vmatprep.subr.mxu0 0.0
    %111 = vmatpush2.msra.mxu0 0.0
    %112 = vmatprep.subr.mxu0 0.0
    %113 = vmatpush2.msra.mxu0 0.0
    %114 = vmatprep.subr.mxu0 0.0
    %115 = vmatpush2.msra.mxu0 0.0
    %116 = vmatprep.mubr.f32.mxu0 0.0
    %117 = vmatmul.mubr.f32.gmra.mxu0 %v35
    %v118 = vpop.f32.mrf.mxu0
    %v119 = vadd.f32 0.0, %v118
    %v120 = vpop.f32.mrf.mxu0
    %121 = vdwg.mxu0
    %v122 = vadd.f32 %v34, %v119
    %123 = vst [vmem:[#allocation5] sm:$0xff] %v122
    // Predicated region
    $region22: #{_apply2d.1} parent=1 // pred_check
      %p124 = pneg %p29
    $region23: #{_apply2d.1} parent=1 // pred_check_branch
      %126 = sbr.rel (%p124) target = $region25
    $region24: #{_apply2d.1} parent=1 // pred_region
      %v127 = vld [vmem:[#allocation5] sm:$0xff]
      %v128 = vld [vmem:[%s2] sm:$0x1]
      %v130 = vlaneseq
      %v131 = vshrl.u32 %v130, 7
      %v132 = vsub.s32 0, %v131
      %v133 = vrot.slane %v128, %v132
      %v135 = vadd.f32 %v127, %v133
      %136 = vst [vmem:[#allocation5] sm:$0xff] %v135
    $region25: #{_apply2d.1} parent=1 // pred_fallthru
      _
    // Predicated region
    $region26: #{_apply2d.1} parent=1 // pred_check
      _
    $region27: #{_apply2d.1} parent=1 // pred_check_branch
      %138 = sbr.rel (0) target = $region29
    $region28: #{_apply2d.1} parent=1 // pred_region
      %s140 = ssub.s32 128, 128
      %141 = vsyncadd [#allocation4], %s140
      %s143 = sshll.u32 [#allocation5], 4
      %s144 = int_to_ptr.vmem [resolvable:$true] %s143
      %146 = dma.vmem_to_hbm [thread:$0]  %s144, 128, %s3, [#allocation4]
    $region29: #{_apply2d.1} parent=1 // pred_fallthru
      _
    // Predicated region
    $region30: #{_apply2d.1} parent=1 // pred_check
      _
    $region31: #{_apply2d.1} parent=1 // pred_check_branch
      %148 = sbr.rel (0) target = $region33
    $region32: #{_apply2d.1} parent=1 // pred_region
      %149 = dma.done [#allocation4], 128
    $region33: #{_apply2d.1} parent=1 // pred_fallthru
      _
    %150 = vsyncpa [#allocation3], 1
    %151 = vsyncpa [#allocation4], 1

</llo_original>
